<compile_context>
chip_gen: v6e
topology: v6e:2x2x1
jax: 0.10.0
libtpu: 0.0.40
codegen_flags: <defaults>
</compile_context>

<pallas_src>
import functools

import jax
import jax.numpy as jnp
from jax.experimental import pallas as pl
from jax.experimental.pallas import tpu as pltpu

LANE = 128


def _round_up(v, m):
    return (v + m - 1) // m * m


def _pick_tile(n_pad):
    # Largest MXU-friendly tile that divides the padded node count.
    for t in (512, 256, 128):
        if n_pad % t == 0:
            return t
    return 128


def gcn_layer_kernel(a_ref, h_ref, w_ref, b_ref, o_ref, acc_ref, *, apply_relu):
    """One GCNConv tile-step: acc[i] += A[i,k] @ (H[k] @ W); finalize bias(+ReLU)."""
    k = pl.program_id(1)

    @pl.when(k == 0)
    def _():
        acc_ref[...] = jnp.zeros_like(acc_ref)

    # (H_k @ W) and A_ik @ (H_k W) on the MXU in bf16, f32 accumulation.
    hw = jnp.dot(h_ref[...].astype(jnp.bfloat16), w_ref[...].astype(jnp.bfloat16),
                 preferred_element_type=jnp.float32)
    acc_ref[...] += jnp.dot(a_ref[...], hw.astype(jnp.bfloat16),
                            preferred_element_type=jnp.float32)

    @pl.when(k == pl.num_programs(1) - 1)
    def _():
        r = acc_ref[...] + b_ref[...]          # bias + ReLU in f32 (v5e-safe)
        if apply_relu:
            r = jnp.maximum(r, 0.0)
        o_ref[...] = r


def _gcn_layer(a_bf16, h, w, b, *, tile_m, tile_k, apply_relu):
    n_pad = a_bf16.shape[0]
    f_in = h.shape[1]
    f_out = w.shape[1]
    grid = (n_pad // tile_m, n_pad // tile_k)

    # VMEM budget sized to the tiles (double-buffered inputs/outputs + scratch).
    est = 2 * (tile_m * tile_k * 2          # A tile (bf16)
               + tile_k * f_in * 4          # H tile (f32)
               + f_in * f_out * 4           # W (resident)
               + f_out * 4                  # bias (resident)
               + tile_m * f_out * 4)        # out tile (f32)
    est += tile_m * f_out * 4               # accumulator scratch
    vmem_limit = int(min(48 * 1024 * 1024, max(32 * 1024 * 1024, 4 * est)))

    kernel = functools.partial(gcn_layer_kernel, apply_relu=apply_relu)
    return pl.pallas_call(
        kernel,
        out_shape=jax.ShapeDtypeStruct((n_pad, f_out), jnp.float32),
        grid_spec=pltpu.PrefetchScalarGridSpec(
            num_scalar_prefetch=0,
            grid=grid,
            in_specs=[
                pl.BlockSpec((tile_m, tile_k), lambda i, k: (i, k)),  # A_norm tile
                pl.BlockSpec((tile_k, f_in), lambda i, k: (k, 0)),    # H rows (k-tile)
                pl.BlockSpec((f_in, f_out), lambda i, k: (0, 0)),     # W (resident)
                pl.BlockSpec((1, f_out), lambda i, k: (0, 0)),        # bias (resident)
            ],
            out_specs=pl.BlockSpec((tile_m, f_out), lambda i, k: (i, 0)),
            scratch_shapes=[pltpu.VMEM((tile_m, f_out), jnp.float32)],
        ),
        compiler_params=pltpu.CompilerParams(
            dimension_semantics=("parallel", "arbitrary"),
            vmem_limit_bytes=vmem_limit,
        ),
    )(a_bf16, h, w, b)


@functools.partial(jax.jit, static_argnames=("num_graphs",))
def gcn_forward(x, edge_index, batch, params, *, num_graphs):
    n, x_dim = x.shape
    w1, b1, w2, b2, w3, b3, wl, bl = params
    hidden = w1.shape[1]

    # --- dense symmetrically-normalized adjacency (GCNConv gcn_norm semantics) ---
    adj = jnp.zeros((n, n), jnp.float32).at[edge_index[0], edge_index[1]].set(1.0)
    idx = jnp.arange(n)
    adj = adj.at[idx, idx].set(1.0)                       # (remaining) self-loops, weight 1
    deg = jnp.sum(adj, axis=1)
    d_inv_sqrt = jnp.where(deg > 0.0, jax.lax.rsqrt(deg), 0.0)
    a_norm = adj * d_inv_sqrt[:, None] * d_inv_sqrt[None, :]

    # --- pad node / feature dims to lane- and MXU-friendly multiples of 128 ---
    n_pad = _round_up(n, LANE)
    f_in_pad = _round_up(x_dim, LANE)
    f_h_pad = _round_up(hidden, LANE)
    tile = _pick_tile(n_pad)

    a_pad = jnp.zeros((n_pad, n_pad), jnp.float32).at[:n, :n].set(a_norm)
    a_bf16 = a_pad.astype(jnp.bfloat16)                   # stream big operand as bf16
    x_pad = jnp.zeros((n_pad, f_in_pad), jnp.float32).at[:n, :x_dim].set(x)

    def pad_w(w, r, c):
        return jnp.zeros((r, c), jnp.float32).at[:w.shape[0], :w.shape[1]].set(w)

    def pad_b(bv, c):
        return jnp.zeros((1, c), jnp.float32).at[0, :bv.shape[0]].set(bv)

    w1p, b1p = pad_w(w1, f_in_pad, f_h_pad), pad_b(b1, f_h_pad)
    w2p, b2p = pad_w(w2, f_h_pad, f_h_pad), pad_b(b2, f_h_pad)
    w3p, b3p = pad_w(w3, f_h_pad, f_h_pad), pad_b(b3, f_h_pad)

    # --- 3x GCNConv as tiled Pallas kernels ---
    h = _gcn_layer(a_bf16, x_pad, w1p, b1p, tile_m=tile, tile_k=tile, apply_relu=True)
    h = _gcn_layer(a_bf16, h, w2p, b2p, tile_m=tile, tile_k=tile, apply_relu=True)
    h = _gcn_layer(a_bf16, h, w3p, b3p, tile_m=tile, tile_k=tile, apply_relu=False)

    # --- global_mean_pool + Linear(hidden, 1) + sigmoid: tiny, lane-width-1
    #     output -> kept in plain JAX per performance guidance. ---
    h = h[:n, :hidden]
    one_hot = (batch[None, :] == jnp.arange(num_graphs)[:, None]).astype(jnp.float32)
    counts = jnp.maximum(jnp.sum(one_hot, axis=1, keepdims=True), 1.0)
    pooled = jnp.dot(one_hot, h) / counts
    logits = jnp.dot(pooled, wl) + bl
    return jax.nn.sigmoid(logits)


def gcn_reference(x, edge_index, batch, params, num_graphs):
    """Pure-JAX f32 reference matching the PyTorch forward."""
    w1, b1, w2, b2, w3, b3, wl, bl = params
    n = x.shape[0]
    adj = jnp.zeros((n, n), jnp.float32).at[edge_index[0], edge_index[1]].set(1.0)
    idx = jnp.arange(n)
    adj = adj.at[idx, idx].set(1.0)
    deg = jnp.sum(adj, axis=1)
    dis = jnp.where(deg > 0, 1.0 / jnp.sqrt(deg), 0.0)
    a = adj * dis[:, None] * dis[None, :]
    h = jnp.maximum(a @ (x @ w1) + b1, 0.0)
    h = jnp.maximum(a @ (h @ w2) + b2, 0.0)
    h = a @ (h @ w3) + b3
    one_hot = (batch[None, :] == jnp.arange(num_graphs)[:, None]).astype(jnp.float32)
    counts = jnp.maximum(one_hot.sum(axis=1, keepdims=True), 1.0)
    g = (one_hot @ h) / counts
    return jax.nn.sigmoid(g @ wl + bl)


def init_params(key, x_dim, hidden):
    ks = jax.random.split(key, 8)
    w1 = jax.random.normal(ks[0], (x_dim, hidden), jnp.float32) * 0.1
    b1 = jax.random.normal(ks[1], (hidden,), jnp.float32) * 0.1
    w2 = jax.random.normal(ks[2], (hidden, hidden), jnp.float32) * 0.1
    b2 = jax.random.normal(ks[3], (hidden,), jnp.float32) * 0.1
    w3 = jax.random.normal(ks[4], (hidden, hidden), jnp.float32) * 0.1
    b3 = jax.random.normal(ks[5], (hidden,), jnp.float32) * 0.1
    wl = jax.random.normal(ks[6], (hidden, 1), jnp.float32) * 0.1
    bl = jax.random.normal(ks[7], (1,), jnp.float32) * 0.1
    return (w1, b1, w2, b2, w3, b3, wl, bl)


if __name__ == "__main__":
    key = jax.random.PRNGKey(0)
    k_x, k_p = jax.random.split(key)

    # Small synthetic batched graph: 2 graphs, 8 nodes each (N=16), x_dim=8, hidden=32.
    N, X_DIM, HIDDEN, NUM_GRAPHS = 16, 8, 32, 2
    x = jax.random.normal(k_x, (N, X_DIM), jnp.float32)

    # Two 8-node rings (undirected: both directions), PyG-style edge_index [2, E].
    src, dst = [], []
    for g in range(NUM_GRAPHS):
        base = g * 8
        for i in range(8):
            a, b = base + i, base + (i + 1) % 8
            src += [a, b]
            dst += [b, a]
    edge_index = jnp.array([src, dst], dtype=jnp.int32)
    batch = jnp.array([0] * 8 + [1] * 8, dtype=jnp.int32)

    params = init_params(k_p, X_DIM, HIDDEN)

    out = gcn_forward(x, edge_index, batch, params, num_graphs=NUM_GRAPHS)
    out = jax.block_until_ready(out)

    ref = gcn_reference(x, edge_index, batch, params, NUM_GRAPHS)
    assert out.shape == (NUM_GRAPHS, 1) and out.dtype == jnp.float32
    assert jnp.allclose(out, ref, atol=5e-2, rtol=5e-2), (out, ref)
    print("KERNEL_OK")
</pallas_src>

<mosaic_0001>
module attributes {stable_mosaic.version = 11 : i64} {
  func.func @gcn_layer_kernel(%arg0: i32, %arg1: i32, %arg2: memref<128x128xbf16, #tpu.memory_space<vmem>>, %arg3: memref<128x128xf32, #tpu.memory_space<vmem>>, %arg4: memref<128x128xf32, #tpu.memory_space<vmem>>, %arg5: memref<1x128xf32, #tpu.memory_space<vmem>>, %arg6: memref<128x128xf32, #tpu.memory_space<vmem>>, %arg7: memref<128x128xf32, #tpu.memory_space<vmem>>) attributes {dimension_semantics = [#tpu.dimension_semantics<parallel>, #tpu.dimension_semantics<arbitrary>], iteration_bounds = array<i64: 1, 1>, scalar_prefetch = 0 : i64, scratch_operands = 1 : i64, tpu.core_type = #tpu.core_type<tc>, window_params = [{transform_indices = @transform_0, window_bounds = array<i64: 128, 128>}, {transform_indices = @transform_1, window_bounds = array<i64: 128, 128>}, {pipeline_mode = #tpu.pipeline_mode<synchronous>, transform_indices = @transform_2, window_bounds = array<i64: 128, 128>}, {pipeline_mode = #tpu.pipeline_mode<synchronous>, transform_indices = @transform_3, window_bounds = array<i64: 1, 128>}, {transform_indices = @transform_4, window_bounds = array<i64: 128, 128>}]} {
    %c0_i32 = arith.constant 0 : i32
    %0 = arith.cmpi eq, %arg1, %c0_i32 : i32
    %1 = arith.extui %0 : i1 to i32
    %c0_i32_0 = arith.constant 0 : i32
    %2 = arith.cmpi ne, %1, %c0_i32_0 : i32
    scf.if %2 {
      %cst_13 = arith.constant 0.000000e+00 : f32
      %17 = vector.broadcast %cst_13 : f32 to vector<128x128xf32>
      %c0_14 = arith.constant 0 : index
      %c0_15 = arith.constant 0 : index
      %18 = vector.load %arg7[%c0_14, %c0_15] : memref<128x128xf32, #tpu.memory_space<vmem>>, vector<128x128xf32>
      tpu.vector_store %arg7[%c0_14, %c0_15], %17 {strides = array<i32>} : memref<128x128xf32, #tpu.memory_space<vmem>>, vector<128x128xf32>,
    } else {
    }
    %c0 = arith.constant 0 : index
    %c0_1 = arith.constant 0 : index
    %3 = vector.load %arg3[%c0, %c0_1] : memref<128x128xf32, #tpu.memory_space<vmem>>, vector<128x128xf32>
    %4 = arith.truncf %3 : vector<128x128xf32> to vector<128x128xbf16>
    %c0_2 = arith.constant 0 : index
    %c0_3 = arith.constant 0 : index
    %5 = vector.load %arg4[%c0_2, %c0_3] : memref<128x128xf32, #tpu.memory_space<vmem>>, vector<128x128xf32>
    %6 = arith.truncf %5 : vector<128x128xf32> to vector<128x128xbf16>
    %cst = arith.constant dense<0.000000e+00> : vector<128x128xf32>
    %7 = tpu.matmul %4, %6, %cst {dimension_numbers = #tpu.dot_dimension_numbers<[1], [0], [0], [1], [0, 0, 1, 1], [], []>} : vector<128x128xbf16>, vector<128x128xbf16>, vector<128x128xf32> -> vector<128x128xf32>
    %c0_4 = arith.constant 0 : index
    %c0_5 = arith.constant 0 : index
    %8 = vector.load %arg7[%c0_4, %c0_5] : memref<128x128xf32, #tpu.memory_space<vmem>>, vector<128x128xf32>
    %c0_6 = arith.constant 0 : index
    %c0_7 = arith.constant 0 : index
    %9 = vector.load %arg2[%c0_6, %c0_7] : memref<128x128xbf16, #tpu.memory_space<vmem>>, vector<128x128xbf16>
    %10 = arith.truncf %7 : vector<128x128xf32> to vector<128x128xbf16>
    %cst_8 = arith.constant dense<0.000000e+00> : vector<128x128xf32>
    %11 = tpu.matmul %9, %10, %cst_8 {dimension_numbers = #tpu.dot_dimension_numbers<[1], [0], [0], [1], [0, 0, 1, 1], [], []>} : vector<128x128xbf16>, vector<128x128xbf16>, vector<128x128xf32> -> vector<128x128xf32>
    %12 = arith.addf %8, %11 : vector<128x128xf32>
    %c0_9 = arith.constant 0 : index
    %c0_10 = arith.constant 0 : index
    %13 = vector.load %arg7[%c0_9, %c0_10] : memref<128x128xf32, #tpu.memory_space<vmem>>, vector<128x128xf32>
    tpu.vector_store %arg7[%c0_9, %c0_10], %12 {strides = array<i32>} : memref<128x128xf32, #tpu.memory_space<vmem>>, vector<128x128xf32>,
    %c0_i32_11 = arith.constant 0 : i32
    %14 = arith.cmpi eq, %arg1, %c0_i32_11 : i32
    %15 = arith.extui %14 : i1 to i32
    %c0_i32_12 = arith.constant 0 : i32
    %16 = arith.cmpi ne, %15, %c0_i32_12 : i32
    scf.if %16 {
      %c0_13 = arith.constant 0 : index
      %c0_14 = arith.constant 0 : index
      %17 = vector.load %arg7[%c0_13, %c0_14] : memref<128x128xf32, #tpu.memory_space<vmem>>, vector<128x128xf32>
      %c0_15 = arith.constant 0 : index
      %c0_16 = arith.constant 0 : index
      %18 = vector.load %arg5[%c0_15, %c0_16] : memref<1x128xf32, #tpu.memory_space<vmem>>, vector<1x128xf32>
      %19 = vector.broadcast %18 : vector<1x128xf32> to vector<128x128xf32>
      %20 = arith.addf %17, %19 : vector<128x128xf32>
      %cst_17 = arith.constant 0.000000e+00 : f32
      %21 = vector.broadcast %cst_17 : f32 to vector<128x128xf32>
      %22 = arith.maximumf %20, %21 : vector<128x128xf32>
      %c0_18 = arith.constant 0 : index
      %c0_19 = arith.constant 0 : index
      %23 = vector.load %arg6[%c0_18, %c0_19] : memref<128x128xf32, #tpu.memory_space<vmem>>, vector<128x128xf32>
      tpu.vector_store %arg6[%c0_18, %c0_19], %22 {strides = array<i32>} : memref<128x128xf32, #tpu.memory_space<vmem>>, vector<128x128xf32>,
    } else {
    }
    return
  }
  func.func @transform_0(%arg0: i32, %arg1: i32) -> (i32, i32) {
    %c0_i32 = arith.constant 0 : i32
    return %arg0, %arg1 : i32, i32
  }
  func.func @transform_1(%arg0: i32, %arg1: i32) -> (i32, i32) {
    %c0_i32 = arith.constant 0 : i32
    %c0_i32_0 = arith.constant 0 : i32
    return %arg1, %c0_i32 : i32, i32
  }
  func.func @transform_2(%arg0: i32, %arg1: i32) -> (i32, i32) {
    %c0_i32 = arith.constant 0 : i32
    %c0_i32_0 = arith.constant 0 : i32
    %c0_i32_1 = arith.constant 0 : i32
    return %c0_i32, %c0_i32_0 : i32, i32
  }
  func.func @transform_3(%arg0: i32, %arg1: i32) -> (i32, i32) {
    %c0_i32 = arith.constant 0 : i32
    %c0_i32_0 = arith.constant 0 : i32
    %c0_i32_1 = arith.constant 0 : i32
    return %c0_i32, %c0_i32_0 : i32, i32
  }
  func.func @transform_4(%arg0: i32, %arg1: i32) -> (i32, i32) {
    %c0_i32 = arith.constant 0 : i32
    %c0_i32_0 = arith.constant 0 : i32
    return %arg0, %c0_i32 : i32, i32
  }
}

module attributes {stable_mosaic.version = 11 : i64} {
  func.func @gcn_layer_kernel(%arg0: i32, %arg1: i32, %arg2: memref<128x128xbf16, #tpu.memory_space<vmem>>, %arg3: memref<128x128xf32, #tpu.memory_space<vmem>>, %arg4: memref<128x128xf32, #tpu.memory_space<vmem>>, %arg5: memref<1x128xf32, #tpu.memory_space<vmem>>, %arg6: memref<128x128xf32, #tpu.memory_space<vmem>>, %arg7: memref<128x128xf32, #tpu.memory_space<vmem>>) attributes {dimension_semantics = [#tpu.dimension_semantics<parallel>, #tpu.dimension_semantics<arbitrary>], iteration_bounds = array<i64: 1, 1>, scalar_prefetch = 0 : i64, scratch_operands = 1 : i64, tpu.core_type = #tpu.core_type<tc>, window_params = [{transform_indices = @transform_0, window_bounds = array<i64: 128, 128>}, {transform_indices = @transform_1, window_bounds = array<i64: 128, 128>}, {pipeline_mode = #tpu.pipeline_mode<synchronous>, transform_indices = @transform_2, window_bounds = array<i64: 128, 128>}, {pipeline_mode = #tpu.pipeline_mode<synchronous>, transform_indices = @transform_3, window_bounds = array<i64: 1, 128>}, {transform_indices = @transform_4, window_bounds = array<i64: 128, 128>}]} {
    %c0_i32 = arith.constant 0 : i32
    %0 = arith.cmpi eq, %arg1, %c0_i32 : i32
    %1 = arith.extui %0 : i1 to i32
    %c0_i32_0 = arith.constant 0 : i32
    %2 = arith.cmpi ne, %1, %c0_i32_0 : i32
    scf.if %2 {
      %cst_13 = arith.constant 0.000000e+00 : f32
      %17 = vector.broadcast %cst_13 : f32 to vector<128x128xf32>
      %c0_14 = arith.constant 0 : index
      %c0_15 = arith.constant 0 : index
      %18 = vector.load %arg7[%c0_14, %c0_15] : memref<128x128xf32, #tpu.memory_space<vmem>>, vector<128x128xf32>
      tpu.vector_store %arg7[%c0_14, %c0_15], %17 {strides = array<i32>} : memref<128x128xf32, #tpu.memory_space<vmem>>, vector<128x128xf32>,
    } else {
    }
    %c0 = arith.constant 0 : index
    %c0_1 = arith.constant 0 : index
    %3 = vector.load %arg3[%c0, %c0_1] : memref<128x128xf32, #tpu.memory_space<vmem>>, vector<128x128xf32>
    %4 = arith.truncf %3 : vector<128x128xf32> to vector<128x128xbf16>
    %c0_2 = arith.constant 0 : index
    %c0_3 = arith.constant 0 : index
    %5 = vector.load %arg4[%c0_2, %c0_3] : memref<128x128xf32, #tpu.memory_space<vmem>>, vector<128x128xf32>
    %6 = arith.truncf %5 : vector<128x128xf32> to vector<128x128xbf16>
    %cst = arith.constant dense<0.000000e+00> : vector<128x128xf32>
    %7 = tpu.matmul %4, %6, %cst {dimension_numbers = #tpu.dot_dimension_numbers<[1], [0], [0], [1], [0, 0, 1, 1], [], []>} : vector<128x128xbf16>, vector<128x128xbf16>, vector<128x128xf32> -> vector<128x128xf32>
    %c0_4 = arith.constant 0 : index
    %c0_5 = arith.constant 0 : index
    %8 = vector.load %arg7[%c0_4, %c0_5] : memref<128x128xf32, #tpu.memory_space<vmem>>, vector<128x128xf32>
    %c0_6 = arith.constant 0 : index
    %c0_7 = arith.constant 0 : index
    %9 = vector.load %arg2[%c0_6, %c0_7] : memref<128x128xbf16, #tpu.memory_space<vmem>>, vector<128x128xbf16>
    %10 = arith.truncf %7 : vector<128x128xf32> to vector<128x128xbf16>
    %cst_8 = arith.constant dense<0.000000e+00> : vector<128x128xf32>
    %11 = tpu.matmul %9, %10, %cst_8 {dimension_numbers = #tpu.dot_dimension_numbers<[1], [0], [0], [1], [0, 0, 1, 1], [], []>} : vector<128x128xbf16>, vector<128x128xbf16>, vector<128x128xf32> -> vector<128x128xf32>
    %12 = arith.addf %8, %11 : vector<128x128xf32>
    %c0_9 = arith.constant 0 : index
    %c0_10 = arith.constant 0 : index
    %13 = vector.load %arg7[%c0_9, %c0_10] : memref<128x128xf32, #tpu.memory_space<vmem>>, vector<128x128xf32>
    tpu.vector_store %arg7[%c0_9, %c0_10], %12 {strides = array<i32>} : memref<128x128xf32, #tpu.memory_space<vmem>>, vector<128x128xf32>,
    %c0_i32_11 = arith.constant 0 : i32
    %14 = arith.cmpi eq, %arg1, %c0_i32_11 : i32
    %15 = arith.extui %14 : i1 to i32
    %c0_i32_12 = arith.constant 0 : i32
    %16 = arith.cmpi ne, %15, %c0_i32_12 : i32
    scf.if %16 {
      %c0_13 = arith.constant 0 : index
      %c0_14 = arith.constant 0 : index
      %17 = vector.load %arg7[%c0_13, %c0_14] : memref<128x128xf32, #tpu.memory_space<vmem>>, vector<128x128xf32>
      %c0_15 = arith.constant 0 : index
      %c0_16 = arith.constant 0 : index
      %18 = vector.load %arg5[%c0_15, %c0_16] : memref<1x128xf32, #tpu.memory_space<vmem>>, vector<1x128xf32>
      %19 = vector.broadcast %18 : vector<1x128xf32> to vector<128x128xf32>
      %20 = arith.addf %17, %19 : vector<128x128xf32>
      %c0_17 = arith.constant 0 : index
      %c0_18 = arith.constant 0 : index
      %21 = vector.load %arg6[%c0_17, %c0_18] : memref<128x128xf32, #tpu.memory_space<vmem>>, vector<128x128xf32>
      tpu.vector_store %arg6[%c0_17, %c0_18], %20 {strides = array<i32>} : memref<128x128xf32, #tpu.memory_space<vmem>>, vector<128x128xf32>,
    } else {
    }
    return
  }
  func.func @transform_0(%arg0: i32, %arg1: i32) -> (i32, i32) {
    %c0_i32 = arith.constant 0 : i32
    return %arg0, %arg1 : i32, i32
  }
  func.func @transform_1(%arg0: i32, %arg1: i32) -> (i32, i32) {
    %c0_i32 = arith.constant 0 : i32
    %c0_i32_0 = arith.constant 0 : i32
    return %arg1, %c0_i32 : i32, i32
  }
  func.func @transform_2(%arg0: i32, %arg1: i32) -> (i32, i32) {
    %c0_i32 = arith.constant 0 : i32
    %c0_i32_0 = arith.constant 0 : i32
    %c0_i32_1 = arith.constant 0 : i32
    return %c0_i32, %c0_i32_0 : i32, i32
  }
  func.func @transform_3(%arg0: i32, %arg1: i32) -> (i32, i32) {
    %c0_i32 = arith.constant 0 : i32
    %c0_i32_0 = arith.constant 0 : i32
    %c0_i32_1 = arith.constant 0 : i32
    return %c0_i32, %c0_i32_0 : i32, i32
  }
  func.func @transform_4(%arg0: i32, %arg1: i32) -> (i32, i32) {
    %c0_i32 = arith.constant 0 : i32
    %c0_i32_0 = arith.constant 0 : i32
    return %arg0, %c0_i32 : i32, i32
  }
}

</mosaic_0001>

<llo_original>
// kernel: gcn_forward.3
$region0: #{gcn_forward.3}
  #allocation0 [shape = 'u32[]', space=smem, size = 0x4, offset = 0x4, fixed_abs, tag = 'smem constant byte address 0x4 - core index']
  #allocation1 [shape = 'u32[144,128]{1,0:T(1,128)}', space=vmem, size = 0x12000, scoped, tag = 'internal scratch']
  #allocation2 [shape = 'f32[128,128]{1,0:T(8,128)}', space=vmem, size = 0x10000, scoped, tag = 'scratch operand']
  %s0 = inlined_call_operand.vmem [shape: bf16[128,128], index: 0, kind: input, shape index: {}]
  %s1 = inlined_call_operand.vmem [shape: f32[128,128], index: 1, kind: input, shape index: {}]
  %s2 = inlined_call_operand.vmem [shape: f32[128,128], index: 2, kind: input, shape index: {}]
  %s3 = inlined_call_operand.vmem [shape: f32[1,128], index: 3, kind: input, shape index: {}]
  %s4 = inlined_call_operand.vmem [shape: f32[128,128], index: 4, kind: output, shape index: {}]
  %s5 = sld [smem:[#allocation0]]
  $region34: #{gcn_forward.3} parent=0
    _
  %s7 = ssub.s32 1, %s5
  %s8 = scalar_select 0, %s7, %s5
  // Predicated region
  $region2: #{gcn_forward.3} parent=0 // pred_check
    _
  $region3: #{gcn_forward.3} parent=0 // pred_check_branch
    %10 = sbr.rel (0) target = $region5
  $region4: #{gcn_forward.3} parent=0 // pred_region
    _
  $region5: #{gcn_forward.3} parent=0 // pred_fallthru
    _
  // Predicated region
  $region6: #{gcn_forward.3} parent=0 // pred_check
    _
  $region7: #{gcn_forward.3} parent=0 // pred_check_branch
    %12 = sbr.rel (0) target = $region9
  $region8: #{gcn_forward.3} parent=0 // pred_region
    _
  $region9: #{gcn_forward.3} parent=0 // pred_fallthru
    _
  // Predicated region
  $region10: #{gcn_forward.3} parent=0 // pred_check
    _
  $region11: #{gcn_forward.3} parent=0 // pred_check_branch
    %14 = sbr.rel (0) target = $region13
  $region12: #{gcn_forward.3} parent=0 // pred_region
    _
  $region13: #{gcn_forward.3} parent=0 // pred_fallthru
    _
  // Predicated region
  $region14: #{gcn_forward.3} parent=0 // pred_check
    _
  $region15: #{gcn_forward.3} parent=0 // pred_check_branch
    %16 = sbr.rel (0) target = $region17
  $region16: #{gcn_forward.3} parent=0 // pred_region
    _
  $region17: #{gcn_forward.3} parent=0 // pred_fallthru
    _
  %p18 = scmp.eq.s32.totalorder 0, 0
  // Predicated region
  $region18: #{gcn_forward.3} parent=0 // pred_check
    %p19 = pneg %p18
  $region19: #{gcn_forward.3} parent=0 // pred_check_branch
    %21 = sbr.rel (%p19) target = $region21
  $region20: #{gcn_forward.3} parent=0 // pred_region
    %22 = vst [vmem:[#allocation2] sm:$0xff] 0.0
    %23 = vst [vmem:[#allocation2 + $0x8] sm:$0xff] 0.0
    %24 = vst [vmem:[#allocation2 + $0x10] sm:$0xff] 0.0
    %25 = vst [vmem:[#allocation2 + $0x18] sm:$0xff] 0.0
    %26 = vst [vmem:[#allocation2 + $0x20] sm:$0xff] 0.0
    %27 = vst [vmem:[#allocation2 + $0x28] sm:$0xff] 0.0
    %28 = vst [vmem:[#allocation2 + $0x30] sm:$0xff] 0.0
    %29 = vst [vmem:[#allocation2 + $0x38] sm:$0xff] 0.0
    %30 = vst [vmem:[#allocation2 + $0x40] sm:$0xff] 0.0
    %31 = vst [vmem:[#allocation2 + $0x48] sm:$0xff] 0.0
    %32 = vst [vmem:[#allocation2 + $0x50] sm:$0xff] 0.0
    %33 = vst [vmem:[#allocation2 + $0x58] sm:$0xff] 0.0
    %34 = vst [vmem:[#allocation2 + $0x60] sm:$0xff] 0.0
    %35 = vst [vmem:[#allocation2 + $0x68] sm:$0xff] 0.0
    %36 = vst [vmem:[#allocation2 + $0x70] sm:$0xff] 0.0
    %37 = vst [vmem:[#allocation2 + $0x78] sm:$0xff] 0.0
  $region21: #{gcn_forward.3} parent=0 // pred_fallthru
    _
  %v38 = vld [vmem:[%s1] sm:$0xff]
  %v39 = vld [vmem:[%s1 + $0x8] sm:$0xff]
  %v40 = vld [vmem:[%s1 + $0x10] sm:$0xff]
  %v41 = vld [vmem:[%s1 + $0x18] sm:$0xff]
  %v42 = vld [vmem:[%s1 + $0x20] sm:$0xff]
  %v43 = vld [vmem:[%s1 + $0x28] sm:$0xff]
  %v44 = vld [vmem:[%s1 + $0x30] sm:$0xff]
  %v45 = vld [vmem:[%s1 + $0x38] sm:$0xff]
  %v46 = vld [vmem:[%s1 + $0x40] sm:$0xff]
  %v47 = vld [vmem:[%s1 + $0x48] sm:$0xff]
  %v48 = vld [vmem:[%s1 + $0x50] sm:$0xff]
  %v49 = vld [vmem:[%s1 + $0x58] sm:$0xff]
  %v50 = vld [vmem:[%s1 + $0x60] sm:$0xff]
  %v51 = vld [vmem:[%s1 + $0x68] sm:$0xff]
  %v52 = vld [vmem:[%s1 + $0x70] sm:$0xff]
  %v53 = vld [vmem:[%s1 + $0x78] sm:$0xff]
  %v54 = vpack.c.bf16 %v39, %v38
  %v55 = vpack.c.bf16 %v41, %v40
  %v56 = vpack.c.bf16 %v43, %v42
  %v57 = vpack.c.bf16 %v45, %v44
  %v58 = vpack.c.bf16 %v47, %v46
  %v59 = vpack.c.bf16 %v49, %v48
  %v60 = vpack.c.bf16 %v51, %v50
  %v61 = vpack.c.bf16 %v53, %v52
  %v62 = vld [vmem:[%s2] sm:$0xff]
  %v63 = vld [vmem:[%s2 + $0x8] sm:$0xff]
  %v64 = vld [vmem:[%s2 + $0x10] sm:$0xff]
  %v65 = vld [vmem:[%s2 + $0x18] sm:$0xff]
  %v66 = vld [vmem:[%s2 + $0x20] sm:$0xff]
  %v67 = vld [vmem:[%s2 + $0x28] sm:$0xff]
  %v68 = vld [vmem:[%s2 + $0x30] sm:$0xff]
  %v69 = vld [vmem:[%s2 + $0x38] sm:$0xff]
  %v70 = vld [vmem:[%s2 + $0x40] sm:$0xff]
  %v71 = vld [vmem:[%s2 + $0x48] sm:$0xff]
  %v72 = vld [vmem:[%s2 + $0x50] sm:$0xff]
  %v73 = vld [vmem:[%s2 + $0x58] sm:$0xff]
  %v74 = vld [vmem:[%s2 + $0x60] sm:$0xff]
  %v75 = vld [vmem:[%s2 + $0x68] sm:$0xff]
  %v76 = vld [vmem:[%s2 + $0x70] sm:$0xff]
  %v77 = vld [vmem:[%s2 + $0x78] sm:$0xff]
  %v78 = vpack.c.bf16 %v63, %v62
  %v79 = vpack.c.bf16 %v65, %v64
  %v80 = vpack.c.bf16 %v67, %v66
  %v81 = vpack.c.bf16 %v69, %v68
  %v82 = vpack.c.bf16 %v71, %v70
  %v83 = vpack.c.bf16 %v73, %v72
  %v84 = vpack.c.bf16 %v75, %v74
  %v85 = vpack.c.bf16 %v77, %v76
  %86 = vmatprep.subr.bf16.mxu0 0
  %87 = vmatpush1.bf16.msra.mxu0 %v85
  %88 = vmatprep.subr.bf16.mxu0 0
  %89 = vmatpush1.bf16.msra.mxu0 %v84
  %90 = vmatprep.subr.bf16.mxu0 0
  %91 = vmatpush1.bf16.msra.mxu0 %v83
  %92 = vmatprep.subr.bf16.mxu0 0
  %93 = vmatpush1.bf16.msra.mxu0 %v82
  %94 = vmatprep.subr.bf16.mxu0 0
  %95 = vmatpush1.bf16.msra.mxu0 %v81
  %96 = vmatprep.subr.bf16.mxu0 0
  %97 = vmatpush1.bf16.msra.mxu0 %v80
  %98 = vmatprep.subr.bf16.mxu0 0
  %99 = vmatpush1.bf16.msra.mxu0 %v79
  %100 = vmatprep.subr.bf16.mxu0 0
  %101 = vmatpush1.bf16.msra.mxu0 %v78
  %102 = vmatprep.subr.bf16.mxu0 0
  %103 = vmatpush2.bf16.msra.mxu0 0
  %104 = vmatprep.subr.bf16.mxu0 0
  %105 = vmatpush2.bf16.msra.mxu0 0
  %106 = vmatprep.subr.bf16.mxu0 0
  %107 = vmatpush2.bf16.msra.mxu0 0
  %108 = vmatprep.subr.bf16.mxu0 0
  %109 = vmatpush2.bf16.msra.mxu0 0
  %110 = vmatprep.subr.bf16.mxu0 0
  %111 = vmatpush2.bf16.msra.mxu0 0
  %112 = vmatprep.subr.bf16.mxu0 0
  %113 = vmatpush2.bf16.msra.mxu0 0
  %114 = vmatprep.subr.bf16.mxu0 0
  %115 = vmatpush2.bf16.msra.mxu0 0
  %116 = vmatprep.subr.bf16.mxu0 0
  %117 = vmatpush2.bf16.msra.mxu0 0
  %118 = vmatprep.mubr.bf16.mxu0 0
  %119 = vmatmul.mubr.bf16.gmra.mxu0 %v54
  %v120 = vpop.f32.mrf.mxu0
  %v121 = vadd.f32 0.0, %v120
  %v122 = vpop.f32.mrf.mxu0
  %v123 = vpop.f32.mrf.mxu0
  %v124 = vadd.f32 0.0, %v123
  %v125 = vpop.f32.mrf.mxu0
  %126 = vmatprep.mubr.bf16.mxu0 0
  %127 = vmatmul.mubr.bf16.gmra.mxu0 %v55
  %v128 = vpop.f32.mrf.mxu0
  %v129 = vadd.f32 0.0, %v128
  %v130 = vpop.f32.mrf.mxu0
  %v131 = vpop.f32.mrf.mxu0
  %v132 = vadd.f32 0.0, %v131
  %v133 = vpop.f32.mrf.mxu0
  %134 = vmatprep.mubr.bf16.mxu0 0
  %135 = vmatmul.mubr.bf16.gmra.mxu0 %v56
  %v136 = vpop.f32.mrf.mxu0
  %v137 = vadd.f32 0.0, %v136
  %v138 = vpop.f32.mrf.mxu0
  %v139 = vpop.f32.mrf.mxu0
  %v140 = vadd.f32 0.0, %v139
  %v141 = vpop.f32.mrf.mxu0
  %142 = vmatprep.mubr.bf16.mxu0 0
  %143 = vmatmul.mubr.bf16.gmra.mxu0 %v57
  %v144 = vpop.f32.mrf.mxu0
  %v145 = vadd.f32 0.0, %v144
  %v146 = vpop.f32.mrf.mxu0
  %v147 = vpop.f32.mrf.mxu0
  %v148 = vadd.f32 0.0, %v147
  %v149 = vpop.f32.mrf.mxu0
  %150 = vmatprep.mubr.bf16.mxu0 0
  %151 = vmatmul.mubr.bf16.gmra.mxu0 %v58
  %v152 = vpop.f32.mrf.mxu0
  %v153 = vadd.f32 0.0, %v152
  %v154 = vpop.f32.mrf.mxu0
  %v155 = vpop.f32.mrf.mxu0
  %v156 = vadd.f32 0.0, %v155
  %v157 = vpop.f32.mrf.mxu0
  %158 = vmatprep.mubr.bf16.mxu0 0
  %159 = vmatmul.mubr.bf16.gmra.mxu0 %v59
  %v160 = vpop.f32.mrf.mxu0
  %v161 = vadd.f32 0.0, %v160
  %v162 = vpop.f32.mrf.mxu0
  %v163 = vpop.f32.mrf.mxu0
  %v164 = vadd.f32 0.0, %v163
  %v165 = vpop.f32.mrf.mxu0
  %166 = vmatprep.mubr.bf16.mxu0 0
  %167 = vmatmul.mubr.bf16.gmra.mxu0 %v60
  %v168 = vpop.f32.mrf.mxu0
  %v169 = vadd.f32 0.0, %v168
  %v170 = vpop.f32.mrf.mxu0
  %v171 = vpop.f32.mrf.mxu0
  %v172 = vadd.f32 0.0, %v171
  %v173 = vpop.f32.mrf.mxu0
  %174 = vmatprep.mubr.bf16.mxu0 0
  %175 = vmatmul.mubr.bf16.gmra.mxu0 %v61
  %v176 = vpop.f32.mrf.mxu0
  %v177 = vadd.f32 0.0, %v176
  %v178 = vpop.f32.mrf.mxu0
  %v179 = vpop.f32.mrf.mxu0
  %v180 = vadd.f32 0.0, %v179
  %v181 = vpop.f32.mrf.mxu0
  %182 = vdwg.mxu0
  %v183 = vld [vmem:[#allocation2] sm:$0xff]
  %v184 = vld [vmem:[#allocation2 + $0x8] sm:$0xff]
  %v185 = vld [vmem:[#allocation2 + $0x10] sm:$0xff]
  %v186 = vld [vmem:[#allocation2 + $0x18] sm:$0xff]
  %v187 = vld [vmem:[#allocation2 + $0x20] sm:$0xff]
  %v188 = vld [vmem:[#allocation2 + $0x28] sm:$0xff]
  %v189 = vld [vmem:[#allocation2 + $0x30] sm:$0xff]
  %v190 = vld [vmem:[#allocation2 + $0x38] sm:$0xff]
  %v191 = vld [vmem:[#allocation2 + $0x40] sm:$0xff]
  %v192 = vld [vmem:[#allocation2 + $0x48] sm:$0xff]
  %v193 = vld [vmem:[#allocation2 + $0x50] sm:$0xff]
  %v194 = vld [vmem:[#allocation2 + $0x58] sm:$0xff]
  %v195 = vld [vmem:[#allocation2 + $0x60] sm:$0xff]
  %v196 = vld [vmem:[#allocation2 + $0x68] sm:$0xff]
  %v197 = vld [vmem:[#allocation2 + $0x70] sm:$0xff]
  %v198 = vld [vmem:[#allocation2 + $0x78] sm:$0xff]
  %v199 = vld [vmem:[%s0] sm:$0xf]
  %v200 = vld [vmem:[%s0 + $0x4] sm:$0xf]
  %v201 = vld [vmem:[%s0 + $0x8] sm:$0xf]
  %v202 = vld [vmem:[%s0 + $0xc] sm:$0xf]
  %v203 = vld [vmem:[%s0 + $0x10] sm:$0xf]
  %v204 = vld [vmem:[%s0 + $0x14] sm:$0xf]
  %v205 = vld [vmem:[%s0 + $0x18] sm:$0xf]
  %v206 = vld [vmem:[%s0 + $0x1c] sm:$0xf]
  %v207 = vld [vmem:[%s0 + $0x20] sm:$0xf]
  %v208 = vld [vmem:[%s0 + $0x24] sm:$0xf]
  %v209 = vld [vmem:[%s0 + $0x28] sm:$0xf]
  %v210 = vld [vmem:[%s0 + $0x2c] sm:$0xf]
  %v211 = vld [vmem:[%s0 + $0x30] sm:$0xf]
  %v212 = vld [vmem:[%s0 + $0x34] sm:$0xf]
  %v213 = vld [vmem:[%s0 + $0x38] sm:$0xf]
  %v214 = vld [vmem:[%s0 + $0x3c] sm:$0xf]
  %v215 = vpack.c.bf16 %v124, %v121
  %v216 = vpack.c.bf16 %v132, %v129
  %v217 = vpack.c.bf16 %v140, %v137
  %v218 = vpack.c.bf16 %v148, %v145
  %v219 = vpack.c.bf16 %v156, %v153
  %v220 = vpack.c.bf16 %v164, %v161
  %v221 = vpack.c.bf16 %v172, %v169
  %v222 = vpack.c.bf16 %v180, %v177
  %v239 = vunpack.c.l.b16 %v199
  %v240 = vunpack.c.l.b16 %v200
  %v241 = vunpack.c.l.b16 %v201
  %v242 = vunpack.c.l.b16 %v202
  %v243 = vunpack.c.l.b16 %v203
  %v244 = vunpack.c.l.b16 %v204
  %v245 = vunpack.c.l.b16 %v205
  %v246 = vunpack.c.l.b16 %v206
  %v247 = vunpack.c.l.b16 %v207
  %v248 = vunpack.c.l.b16 %v208
  %v249 = vunpack.c.l.b16 %v209
  %v250 = vunpack.c.l.b16 %v210
  %v251 = vunpack.c.l.b16 %v211
  %v252 = vunpack.c.l.b16 %v212
  %v253 = vunpack.c.l.b16 %v213
  %v254 = vunpack.c.l.b16 %v214
  %v255 = vpack.c.b16 %v240, %v239
  %v256 = vpack.c.b16 %v242, %v241
  %v257 = vpack.c.b16 %v244, %v243
  %v258 = vpack.c.b16 %v246, %v245
  %v259 = vpack.c.b16 %v248, %v247
  %v260 = vpack.c.b16 %v250, %v249
  %v261 = vpack.c.b16 %v252, %v251
  %v262 = vpack.c.b16 %v254, %v253
  %271 = vmatprep.subr.bf16.mxu0 0
  %272 = vmatpush1.bf16.msra.mxu0 %v222
  %273 = vmatprep.subr.bf16.mxu0 0
  %274 = vmatpush1.bf16.msra.mxu0 %v221
  %275 = vmatprep.subr.bf16.mxu0 0
  %276 = vmatpush1.bf16.msra.mxu0 %v220
  %277 = vmatprep.subr.bf16.mxu0 0
  %278 = vmatpush1.bf16.msra.mxu0 %v219
  %279 = vmatprep.subr.bf16.mxu0 0
  %280 = vmatpush1.bf16.msra.mxu0 %v218
  %281 = vmatprep.subr.bf16.mxu0 0
  %282 = vmatpush1.bf16.msra.mxu0 %v217
  %283 = vmatprep.subr.bf16.mxu0 0
  %284 = vmatpush1.bf16.msra.mxu0 %v216
  %285 = vmatprep.subr.bf16.mxu0 0
  %286 = vmatpush1.bf16.msra.mxu0 %v215
  %287 = vmatprep.subr.bf16.mxu0 0
  %288 = vmatpush2.bf16.msra.mxu0 0
  %289 = vmatprep.subr.bf16.mxu0 0
  %290 = vmatpush2.bf16.msra.mxu0 0
  %291 = vmatprep.subr.bf16.mxu0 0
  %292 = vmatpush2.bf16.msra.mxu0 0
  %293 = vmatprep.subr.bf16.mxu0 0
  %294 = vmatpush2.bf16.msra.mxu0 0
  %295 = vmatprep.subr.bf16.mxu0 0
  %296 = vmatpush2.bf16.msra.mxu0 0
  %297 = vmatprep.subr.bf16.mxu0 0
  %298 = vmatpush2.bf16.msra.mxu0 0
  %299 = vmatprep.subr.bf16.mxu0 0
  %300 = vmatpush2.bf16.msra.mxu0 0
  %301 = vmatprep.subr.bf16.mxu0 0
  %302 = vmatpush2.bf16.msra.mxu0 0
  %303 = vmatprep.mubr.bf16.mxu0 0
  %304 = vmatmul.mubr.bf16.gmra.mxu0 %v255
  %v305 = vpop.f32.mrf.mxu0
  %v306 = vadd.f32 0.0, %v305
  %v307 = vpop.f32.mrf.mxu0
  %v308 = vpop.f32.mrf.mxu0
  %v309 = vadd.f32 0.0, %v308
  %v310 = vpop.f32.mrf.mxu0
  %311 = vmatprep.mubr.bf16.mxu0 0
  %312 = vmatmul.mubr.bf16.gmra.mxu0 %v256
  %v313 = vpop.f32.mrf.mxu0
  %v314 = vadd.f32 0.0, %v313
  %v315 = vpop.f32.mrf.mxu0
  %v316 = vpop.f32.mrf.mxu0
  %v317 = vadd.f32 0.0, %v316
  %v318 = vpop.f32.mrf.mxu0
  %319 = vmatprep.mubr.bf16.mxu0 0
  %320 = vmatmul.mubr.bf16.gmra.mxu0 %v257
  %v321 = vpop.f32.mrf.mxu0
  %v322 = vadd.f32 0.0, %v321
  %v323 = vpop.f32.mrf.mxu0
  %v324 = vpop.f32.mrf.mxu0
  %v325 = vadd.f32 0.0, %v324
  %v326 = vpop.f32.mrf.mxu0
  %327 = vmatprep.mubr.bf16.mxu0 0
  %328 = vmatmul.mubr.bf16.gmra.mxu0 %v258
  %v329 = vpop.f32.mrf.mxu0
  %v330 = vadd.f32 0.0, %v329
  %v331 = vpop.f32.mrf.mxu0
  %v332 = vpop.f32.mrf.mxu0
  %v333 = vadd.f32 0.0, %v332
  %v334 = vpop.f32.mrf.mxu0
  %335 = vmatprep.mubr.bf16.mxu0 0
  %336 = vmatmul.mubr.bf16.gmra.mxu0 %v259
  %v337 = vpop.f32.mrf.mxu0
  %v338 = vadd.f32 0.0, %v337
  %v339 = vpop.f32.mrf.mxu0
  %v340 = vpop.f32.mrf.mxu0
  %v341 = vadd.f32 0.0, %v340
  %v342 = vpop.f32.mrf.mxu0
  %343 = vmatprep.mubr.bf16.mxu0 0
  %344 = vmatmul.mubr.bf16.gmra.mxu0 %v260
  %v345 = vpop.f32.mrf.mxu0
  %v346 = vadd.f32 0.0, %v345
  %v347 = vpop.f32.mrf.mxu0
  %v348 = vpop.f32.mrf.mxu0
  %v349 = vadd.f32 0.0, %v348
  %v350 = vpop.f32.mrf.mxu0
  %351 = vmatprep.mubr.bf16.mxu0 0
  %352 = vmatmul.mubr.bf16.gmra.mxu0 %v261
  %v353 = vpop.f32.mrf.mxu0
  %v354 = vadd.f32 0.0, %v353
  %v355 = vpop.f32.mrf.mxu0
  %v356 = vpop.f32.mrf.mxu0
  %v357 = vadd.f32 0.0, %v356
  %v358 = vpop.f32.mrf.mxu0
  %359 = vmatprep.mubr.bf16.mxu0 0
  %360 = vmatmul.mubr.bf16.gmra.mxu0 %v262
  %v361 = vpop.f32.mrf.mxu0
  %v362 = vadd.f32 0.0, %v361
  %v363 = vpop.f32.mrf.mxu0
  %v364 = vpop.f32.mrf.mxu0
  %v365 = vadd.f32 0.0, %v364
  %v366 = vpop.f32.mrf.mxu0
  %367 = vdwg.mxu0
  %v368 = vadd.f32 %v183, %v306
  %v369 = vadd.f32 %v184, %v309
  %v370 = vadd.f32 %v185, %v314
  %v371 = vadd.f32 %v186, %v317
  %v372 = vadd.f32 %v187, %v322
  %v373 = vadd.f32 %v188, %v325
  %v374 = vadd.f32 %v189, %v330
  %v375 = vadd.f32 %v190, %v333
  %v376 = vadd.f32 %v191, %v338
  %v377 = vadd.f32 %v192, %v341
  %v378 = vadd.f32 %v193, %v346
  %v379 = vadd.f32 %v194, %v349
  %v380 = vadd.f32 %v195, %v354
  %v381 = vadd.f32 %v196, %v357
  %v382 = vadd.f32 %v197, %v362
  %v383 = vadd.f32 %v198, %v365
  %384 = vst [vmem:[#allocation2] sm:$0xff] %v368
  %385 = vst [vmem:[#allocation2 + $0x8] sm:$0xff] %v369
  %386 = vst [vmem:[#allocation2 + $0x10] sm:$0xff] %v370
  %387 = vst [vmem:[#allocation2 + $0x18] sm:$0xff] %v371
  %388 = vst [vmem:[#allocation2 + $0x20] sm:$0xff] %v372
  %389 = vst [vmem:[#allocation2 + $0x28] sm:$0xff] %v373
  %390 = vst [vmem:[#allocation2 + $0x30] sm:$0xff] %v374
  %391 = vst [vmem:[#allocation2 + $0x38] sm:$0xff] %v375
  %392 = vst [vmem:[#allocation2 + $0x40] sm:$0xff] %v376
  %393 = vst [vmem:[#allocation2 + $0x48] sm:$0xff] %v377
  %394 = vst [vmem:[#allocation2 + $0x50] sm:$0xff] %v378
  %395 = vst [vmem:[#allocation2 + $0x58] sm:$0xff] %v379
  %396 = vst [vmem:[#allocation2 + $0x60] sm:$0xff] %v380
  %397 = vst [vmem:[#allocation2 + $0x68] sm:$0xff] %v381
  %398 = vst [vmem:[#allocation2 + $0x70] sm:$0xff] %v382
  %399 = vst [vmem:[#allocation2 + $0x78] sm:$0xff] %v383
  // Predicated region
  $region22: #{gcn_forward.3} parent=0 // pred_check
    %p400 = pneg %p18
  $region23: #{gcn_forward.3} parent=0 // pred_check_branch
    %402 = sbr.rel (%p400) target = $region25
  $region24: #{gcn_forward.3} parent=0 // pred_region
    %v403 = vld [vmem:[#allocation2] sm:$0xff]
    %v404 = vld [vmem:[#allocation2 + $0x8] sm:$0xff]
    %v405 = vld [vmem:[#allocation2 + $0x10] sm:$0xff]
    %v406 = vld [vmem:[#allocation2 + $0x18] sm:$0xff]
    %v407 = vld [vmem:[#allocation2 + $0x20] sm:$0xff]
    %v408 = vld [vmem:[#allocation2 + $0x28] sm:$0xff]
    %v409 = vld [vmem:[#allocation2 + $0x30] sm:$0xff]
    %v410 = vld [vmem:[#allocation2 + $0x38] sm:$0xff]
    %v411 = vld [vmem:[#allocation2 + $0x40] sm:$0xff]
    %v412 = vld [vmem:[#allocation2 + $0x48] sm:$0xff]
    %v413 = vld [vmem:[#allocation2 + $0x50] sm:$0xff]
    %v414 = vld [vmem:[#allocation2 + $0x58] sm:$0xff]
    %v415 = vld [vmem:[#allocation2 + $0x60] sm:$0xff]
    %v416 = vld [vmem:[#allocation2 + $0x68] sm:$0xff]
    %v417 = vld [vmem:[#allocation2 + $0x70] sm:$0xff]
    %v418 = vld [vmem:[#allocation2 + $0x78] sm:$0xff]
    %v419 = vld [vmem:[%s3] sm:$0x1]
    %v421 = vlaneseq
    %v422 = vshrl.u32 %v421, 7
    %v423 = vsub.s32 0, %v422
    %v424 = vrot.slane %v419, %v423
    %v426 = vadd.f32 %v403, %v424
    %v427 = vadd.f32 %v404, %v424
    %v428 = vadd.f32 %v405, %v424
    %v429 = vadd.f32 %v406, %v424
    %v430 = vadd.f32 %v407, %v424
    %v431 = vadd.f32 %v408, %v424
    %v432 = vadd.f32 %v409, %v424
    %v433 = vadd.f32 %v410, %v424
    %v434 = vadd.f32 %v411, %v424
    %v435 = vadd.f32 %v412, %v424
    %v436 = vadd.f32 %v413, %v424
    %v437 = vadd.f32 %v414, %v424
    %v438 = vadd.f32 %v415, %v424
    %v439 = vadd.f32 %v416, %v424
    %v440 = vadd.f32 %v417, %v424
    %v441 = vadd.f32 %v418, %v424
    %v442 = vmax.f32 %v426, 0.0
    %v443 = vmax.f32 %v427, 0.0
    %v444 = vmax.f32 %v428, 0.0
    %v445 = vmax.f32 %v429, 0.0
    %v446 = vmax.f32 %v430, 0.0
    %v447 = vmax.f32 %v431, 0.0
    %v448 = vmax.f32 %v432, 0.0
    %v449 = vmax.f32 %v433, 0.0
    %v450 = vmax.f32 %v434, 0.0
    %v451 = vmax.f32 %v435, 0.0
    %v452 = vmax.f32 %v436, 0.0
    %v453 = vmax.f32 %v437, 0.0
    %v454 = vmax.f32 %v438, 0.0
    %v455 = vmax.f32 %v439, 0.0
    %v456 = vmax.f32 %v440, 0.0
    %v457 = vmax.f32 %v441, 0.0
    %458 = vst [vmem:[%s4] sm:$0xff] %v442
    %459 = vst [vmem:[%s4 + $0x8] sm:$0xff] %v443
    %460 = vst [vmem:[%s4 + $0x10] sm:$0xff] %v444
    %461 = vst [vmem:[%s4 + $0x18] sm:$0xff] %v445
    %462 = vst [vmem:[%s4 + $0x20] sm:$0xff] %v446
    %463 = vst [vmem:[%s4 + $0x28] sm:$0xff] %v447
    %464 = vst [vmem:[%s4 + $0x30] sm:$0xff] %v448
    %465 = vst [vmem:[%s4 + $0x38] sm:$0xff] %v449
    %466 = vst [vmem:[%s4 + $0x40] sm:$0xff] %v450
    %467 = vst [vmem:[%s4 + $0x48] sm:$0xff] %v451
    %468 = vst [vmem:[%s4 + $0x50] sm:$0xff] %v452
    %469 = vst [vmem:[%s4 + $0x58] sm:$0xff] %v453
    %470 = vst [vmem:[%s4 + $0x60] sm:$0xff] %v454
    %471 = vst [vmem:[%s4 + $0x68] sm:$0xff] %v455
    %472 = vst [vmem:[%s4 + $0x70] sm:$0xff] %v456
    %473 = vst [vmem:[%s4 + $0x78] sm:$0xff] %v457
  $region25: #{gcn_forward.3} parent=0 // pred_fallthru
    _
  // Predicated region
  $region26: #{gcn_forward.3} parent=0 // pred_check
    _
  $region27: #{gcn_forward.3} parent=0 // pred_check_branch
    %475 = sbr.rel (0) target = $region29
  $region28: #{gcn_forward.3} parent=0 // pred_region
    _
  $region29: #{gcn_forward.3} parent=0 // pred_fallthru
    _
  // Predicated region
  $region30: #{gcn_forward.3} parent=0 // pred_check
    _
  $region31: #{gcn_forward.3} parent=0 // pred_check_branch
    %477 = sbr.rel (0) target = $region33
  $region32: #{gcn_forward.3} parent=0 // pred_region
    _
  $region33: #{gcn_forward.3} parent=0 // pred_fallthru
    _

// kernel: gcn_forward.5
$region0: #{gcn_forward.5}
  #allocation0 [shape = 'u32[]', space=smem, size = 0x4, offset = 0x4, fixed_abs, tag = 'smem constant byte address 0x4 - core index']
  #allocation1 [shape = 'u32[144,128]{1,0:T(1,128)}', space=vmem, size = 0x12000, scoped, tag = 'internal scratch']
  #allocation2 [shape = 'f32[128,128]{1,0:T(8,128)}', space=vmem, size = 0x10000, scoped, tag = 'scratch operand']
  %s0 = inlined_call_operand.vmem [shape: bf16[128,128], index: 0, kind: input, shape index: {}]
  %s1 = inlined_call_operand.vmem [shape: f32[128,128], index: 1, kind: input, shape index: {}]
  %s2 = inlined_call_operand.vmem [shape: f32[128,128], index: 2, kind: input, shape index: {}]
  %s3 = inlined_call_operand.vmem [shape: f32[1,128], index: 3, kind: input, shape index: {}]
  %s4 = inlined_call_operand.vmem [shape: f32[128,128], index: 4, kind: output, shape index: {}]
  %s5 = sld [smem:[#allocation0]]
  $region34: #{gcn_forward.5} parent=0
    _
  %s7 = ssub.s32 1, %s5
  %s8 = scalar_select 0, %s7, %s5
  // Predicated region
  $region2: #{gcn_forward.5} parent=0 // pred_check
    _
  $region3: #{gcn_forward.5} parent=0 // pred_check_branch
    %10 = sbr.rel (0) target = $region5
  $region4: #{gcn_forward.5} parent=0 // pred_region
    _
  $region5: #{gcn_forward.5} parent=0 // pred_fallthru
    _
  // Predicated region
  $region6: #{gcn_forward.5} parent=0 // pred_check
    _
  $region7: #{gcn_forward.5} parent=0 // pred_check_branch
    %12 = sbr.rel (0) target = $region9
  $region8: #{gcn_forward.5} parent=0 // pred_region
    _
  $region9: #{gcn_forward.5} parent=0 // pred_fallthru
    _
  // Predicated region
  $region10: #{gcn_forward.5} parent=0 // pred_check
    _
  $region11: #{gcn_forward.5} parent=0 // pred_check_branch
    %14 = sbr.rel (0) target = $region13
  $region12: #{gcn_forward.5} parent=0 // pred_region
    _
  $region13: #{gcn_forward.5} parent=0 // pred_fallthru
    _
  // Predicated region
  $region14: #{gcn_forward.5} parent=0 // pred_check
    _
  $region15: #{gcn_forward.5} parent=0 // pred_check_branch
    %16 = sbr.rel (0) target = $region17
  $region16: #{gcn_forward.5} parent=0 // pred_region
    _
  $region17: #{gcn_forward.5} parent=0 // pred_fallthru
    _
  %p18 = scmp.eq.s32.totalorder 0, 0
  // Predicated region
  $region18: #{gcn_forward.5} parent=0 // pred_check
    %p19 = pneg %p18
  $region19: #{gcn_forward.5} parent=0 // pred_check_branch
    %21 = sbr.rel (%p19) target = $region21
  $region20: #{gcn_forward.5} parent=0 // pred_region
    %22 = vst [vmem:[#allocation2] sm:$0xff] 0.0
    %23 = vst [vmem:[#allocation2 + $0x8] sm:$0xff] 0.0
    %24 = vst [vmem:[#allocation2 + $0x10] sm:$0xff] 0.0
    %25 = vst [vmem:[#allocation2 + $0x18] sm:$0xff] 0.0
    %26 = vst [vmem:[#allocation2 + $0x20] sm:$0xff] 0.0
    %27 = vst [vmem:[#allocation2 + $0x28] sm:$0xff] 0.0
    %28 = vst [vmem:[#allocation2 + $0x30] sm:$0xff] 0.0
    %29 = vst [vmem:[#allocation2 + $0x38] sm:$0xff] 0.0
    %30 = vst [vmem:[#allocation2 + $0x40] sm:$0xff] 0.0
    %31 = vst [vmem:[#allocation2 + $0x48] sm:$0xff] 0.0
    %32 = vst [vmem:[#allocation2 + $0x50] sm:$0xff] 0.0
    %33 = vst [vmem:[#allocation2 + $0x58] sm:$0xff] 0.0
    %34 = vst [vmem:[#allocation2 + $0x60] sm:$0xff] 0.0
    %35 = vst [vmem:[#allocation2 + $0x68] sm:$0xff] 0.0
    %36 = vst [vmem:[#allocation2 + $0x70] sm:$0xff] 0.0
    %37 = vst [vmem:[#allocation2 + $0x78] sm:$0xff] 0.0
  $region21: #{gcn_forward.5} parent=0 // pred_fallthru
    _
  %v38 = vld [vmem:[%s1] sm:$0xff]
  %v39 = vld [vmem:[%s1 + $0x8] sm:$0xff]
  %v40 = vld [vmem:[%s1 + $0x10] sm:$0xff]
  %v41 = vld [vmem:[%s1 + $0x18] sm:$0xff]
  %v42 = vld [vmem:[%s1 + $0x20] sm:$0xff]
  %v43 = vld [vmem:[%s1 + $0x28] sm:$0xff]
  %v44 = vld [vmem:[%s1 + $0x30] sm:$0xff]
  %v45 = vld [vmem:[%s1 + $0x38] sm:$0xff]
  %v46 = vld [vmem:[%s1 + $0x40] sm:$0xff]
  %v47 = vld [vmem:[%s1 + $0x48] sm:$0xff]
  %v48 = vld [vmem:[%s1 + $0x50] sm:$0xff]
  %v49 = vld [vmem:[%s1 + $0x58] sm:$0xff]
  %v50 = vld [vmem:[%s1 + $0x60] sm:$0xff]
  %v51 = vld [vmem:[%s1 + $0x68] sm:$0xff]
  %v52 = vld [vmem:[%s1 + $0x70] sm:$0xff]
  %v53 = vld [vmem:[%s1 + $0x78] sm:$0xff]
  %v54 = vpack.c.bf16 %v39, %v38
  %v55 = vpack.c.bf16 %v41, %v40
  %v56 = vpack.c.bf16 %v43, %v42
  %v57 = vpack.c.bf16 %v45, %v44
  %v58 = vpack.c.bf16 %v47, %v46
  %v59 = vpack.c.bf16 %v49, %v48
  %v60 = vpack.c.bf16 %v51, %v50
  %v61 = vpack.c.bf16 %v53, %v52
  %v62 = vld [vmem:[%s2] sm:$0xff]
  %v63 = vld [vmem:[%s2 + $0x8] sm:$0xff]
  %v64 = vld [vmem:[%s2 + $0x10] sm:$0xff]
  %v65 = vld [vmem:[%s2 + $0x18] sm:$0xff]
  %v66 = vld [vmem:[%s2 + $0x20] sm:$0xff]
  %v67 = vld [vmem:[%s2 + $0x28] sm:$0xff]
  %v68 = vld [vmem:[%s2 + $0x30] sm:$0xff]
  %v69 = vld [vmem:[%s2 + $0x38] sm:$0xff]
  %v70 = vld [vmem:[%s2 + $0x40] sm:$0xff]
  %v71 = vld [vmem:[%s2 + $0x48] sm:$0xff]
  %v72 = vld [vmem:[%s2 + $0x50] sm:$0xff]
  %v73 = vld [vmem:[%s2 + $0x58] sm:$0xff]
  %v74 = vld [vmem:[%s2 + $0x60] sm:$0xff]
  %v75 = vld [vmem:[%s2 + $0x68] sm:$0xff]
  %v76 = vld [vmem:[%s2 + $0x70] sm:$0xff]
  %v77 = vld [vmem:[%s2 + $0x78] sm:$0xff]
  %v78 = vpack.c.bf16 %v63, %v62
  %v79 = vpack.c.bf16 %v65, %v64
  %v80 = vpack.c.bf16 %v67, %v66
  %v81 = vpack.c.bf16 %v69, %v68
  %v82 = vpack.c.bf16 %v71, %v70
  %v83 = vpack.c.bf16 %v73, %v72
  %v84 = vpack.c.bf16 %v75, %v74
  %v85 = vpack.c.bf16 %v77, %v76
  %86 = vmatprep.subr.bf16.mxu0 0
  %87 = vmatpush1.bf16.msra.mxu0 %v85
  %88 = vmatprep.subr.bf16.mxu0 0
  %89 = vmatpush1.bf16.msra.mxu0 %v84
  %90 = vmatprep.subr.bf16.mxu0 0
  %91 = vmatpush1.bf16.msra.mxu0 %v83
  %92 = vmatprep.subr.bf16.mxu0 0
  %93 = vmatpush1.bf16.msra.mxu0 %v82
  %94 = vmatprep.subr.bf16.mxu0 0
  %95 = vmatpush1.bf16.msra.mxu0 %v81
  %96 = vmatprep.subr.bf16.mxu0 0
  %97 = vmatpush1.bf16.msra.mxu0 %v80
  %98 = vmatprep.subr.bf16.mxu0 0
  %99 = vmatpush1.bf16.msra.mxu0 %v79
  %100 = vmatprep.subr.bf16.mxu0 0
  %101 = vmatpush1.bf16.msra.mxu0 %v78
  %102 = vmatprep.subr.bf16.mxu0 0
  %103 = vmatpush2.bf16.msra.mxu0 0
  %104 = vmatprep.subr.bf16.mxu0 0
  %105 = vmatpush2.bf16.msra.mxu0 0
  %106 = vmatprep.subr.bf16.mxu0 0
  %107 = vmatpush2.bf16.msra.mxu0 0
  %108 = vmatprep.subr.bf16.mxu0 0
  %109 = vmatpush2.bf16.msra.mxu0 0
  %110 = vmatprep.subr.bf16.mxu0 0
  %111 = vmatpush2.bf16.msra.mxu0 0
  %112 = vmatprep.subr.bf16.mxu0 0
  %113 = vmatpush2.bf16.msra.mxu0 0
  %114 = vmatprep.subr.bf16.mxu0 0
  %115 = vmatpush2.bf16.msra.mxu0 0
  %116 = vmatprep.subr.bf16.mxu0 0
  %117 = vmatpush2.bf16.msra.mxu0 0
  %118 = vmatprep.mubr.bf16.mxu0 0
  %119 = vmatmul.mubr.bf16.gmra.mxu0 %v54
  %v120 = vpop.f32.mrf.mxu0
  %v121 = vadd.f32 0.0, %v120
  %v122 = vpop.f32.mrf.mxu0
  %v123 = vpop.f32.mrf.mxu0
  %v124 = vadd.f32 0.0, %v123
  %v125 = vpop.f32.mrf.mxu0
  %126 = vmatprep.mubr.bf16.mxu0 0
  %127 = vmatmul.mubr.bf16.gmra.mxu0 %v55
  %v128 = vpop.f32.mrf.mxu0
  %v129 = vadd.f32 0.0, %v128
  %v130 = vpop.f32.mrf.mxu0
  %v131 = vpop.f32.mrf.mxu0
  %v132 = vadd.f32 0.0, %v131
  %v133 = vpop.f32.mrf.mxu0
  %134 = vmatprep.mubr.bf16.mxu0 0
  %135 = vmatmul.mubr.bf16.gmra.mxu0 %v56
  %v136 = vpop.f32.mrf.mxu0
  %v137 = vadd.f32 0.0, %v136
  %v138 = vpop.f32.mrf.mxu0
  %v139 = vpop.f32.mrf.mxu0
  %v140 = vadd.f32 0.0, %v139
  %v141 = vpop.f32.mrf.mxu0
  %142 = vmatprep.mubr.bf16.mxu0 0
  %143 = vmatmul.mubr.bf16.gmra.mxu0 %v57
  %v144 = vpop.f32.mrf.mxu0
  %v145 = vadd.f32 0.0, %v144
  %v146 = vpop.f32.mrf.mxu0
  %v147 = vpop.f32.mrf.mxu0
  %v148 = vadd.f32 0.0, %v147
  %v149 = vpop.f32.mrf.mxu0
  %150 = vmatprep.mubr.bf16.mxu0 0
  %151 = vmatmul.mubr.bf16.gmra.mxu0 %v58
  %v152 = vpop.f32.mrf.mxu0
  %v153 = vadd.f32 0.0, %v152
  %v154 = vpop.f32.mrf.mxu0
  %v155 = vpop.f32.mrf.mxu0
  %v156 = vadd.f32 0.0, %v155
  %v157 = vpop.f32.mrf.mxu0
  %158 = vmatprep.mubr.bf16.mxu0 0
  %159 = vmatmul.mubr.bf16.gmra.mxu0 %v59
  %v160 = vpop.f32.mrf.mxu0
  %v161 = vadd.f32 0.0, %v160
  %v162 = vpop.f32.mrf.mxu0
  %v163 = vpop.f32.mrf.mxu0
  %v164 = vadd.f32 0.0, %v163
  %v165 = vpop.f32.mrf.mxu0
  %166 = vmatprep.mubr.bf16.mxu0 0
  %167 = vmatmul.mubr.bf16.gmra.mxu0 %v60
  %v168 = vpop.f32.mrf.mxu0
  %v169 = vadd.f32 0.0, %v168
  %v170 = vpop.f32.mrf.mxu0
  %v171 = vpop.f32.mrf.mxu0
  %v172 = vadd.f32 0.0, %v171
  %v173 = vpop.f32.mrf.mxu0
  %174 = vmatprep.mubr.bf16.mxu0 0
  %175 = vmatmul.mubr.bf16.gmra.mxu0 %v61
  %v176 = vpop.f32.mrf.mxu0
  %v177 = vadd.f32 0.0, %v176
  %v178 = vpop.f32.mrf.mxu0
  %v179 = vpop.f32.mrf.mxu0
  %v180 = vadd.f32 0.0, %v179
  %v181 = vpop.f32.mrf.mxu0
  %182 = vdwg.mxu0
  %v183 = vld [vmem:[#allocation2] sm:$0xff]
  %v184 = vld [vmem:[#allocation2 + $0x8] sm:$0xff]
  %v185 = vld [vmem:[#allocation2 + $0x10] sm:$0xff]
  %v186 = vld [vmem:[#allocation2 + $0x18] sm:$0xff]
  %v187 = vld [vmem:[#allocation2 + $0x20] sm:$0xff]
  %v188 = vld [vmem:[#allocation2 + $0x28] sm:$0xff]
  %v189 = vld [vmem:[#allocation2 + $0x30] sm:$0xff]
  %v190 = vld [vmem:[#allocation2 + $0x38] sm:$0xff]
  %v191 = vld [vmem:[#allocation2 + $0x40] sm:$0xff]
  %v192 = vld [vmem:[#allocation2 + $0x48] sm:$0xff]
  %v193 = vld [vmem:[#allocation2 + $0x50] sm:$0xff]
  %v194 = vld [vmem:[#allocation2 + $0x58] sm:$0xff]
  %v195 = vld [vmem:[#allocation2 + $0x60] sm:$0xff]
  %v196 = vld [vmem:[#allocation2 + $0x68] sm:$0xff]
  %v197 = vld [vmem:[#allocation2 + $0x70] sm:$0xff]
  %v198 = vld [vmem:[#allocation2 + $0x78] sm:$0xff]
  %v199 = vld [vmem:[%s0] sm:$0xf]
  %v200 = vld [vmem:[%s0 + $0x4] sm:$0xf]
  %v201 = vld [vmem:[%s0 + $0x8] sm:$0xf]
  %v202 = vld [vmem:[%s0 + $0xc] sm:$0xf]
  %v203 = vld [vmem:[%s0 + $0x10] sm:$0xf]
  %v204 = vld [vmem:[%s0 + $0x14] sm:$0xf]
  %v205 = vld [vmem:[%s0 + $0x18] sm:$0xf]
  %v206 = vld [vmem:[%s0 + $0x1c] sm:$0xf]
  %v207 = vld [vmem:[%s0 + $0x20] sm:$0xf]
  %v208 = vld [vmem:[%s0 + $0x24] sm:$0xf]
  %v209 = vld [vmem:[%s0 + $0x28] sm:$0xf]
  %v210 = vld [vmem:[%s0 + $0x2c] sm:$0xf]
  %v211 = vld [vmem:[%s0 + $0x30] sm:$0xf]
  %v212 = vld [vmem:[%s0 + $0x34] sm:$0xf]
  %v213 = vld [vmem:[%s0 + $0x38] sm:$0xf]
  %v214 = vld [vmem:[%s0 + $0x3c] sm:$0xf]
  %v215 = vpack.c.bf16 %v124, %v121
  %v216 = vpack.c.bf16 %v132, %v129
  %v217 = vpack.c.bf16 %v140, %v137
  %v218 = vpack.c.bf16 %v148, %v145
  %v219 = vpack.c.bf16 %v156, %v153
  %v220 = vpack.c.bf16 %v164, %v161
  %v221 = vpack.c.bf16 %v172, %v169
  %v222 = vpack.c.bf16 %v180, %v177
  %v239 = vunpack.c.l.b16 %v199
  %v240 = vunpack.c.l.b16 %v200
  %v241 = vunpack.c.l.b16 %v201
  %v242 = vunpack.c.l.b16 %v202
  %v243 = vunpack.c.l.b16 %v203
  %v244 = vunpack.c.l.b16 %v204
  %v245 = vunpack.c.l.b16 %v205
  %v246 = vunpack.c.l.b16 %v206
  %v247 = vunpack.c.l.b16 %v207
  %v248 = vunpack.c.l.b16 %v208
  %v249 = vunpack.c.l.b16 %v209
  %v250 = vunpack.c.l.b16 %v210
  %v251 = vunpack.c.l.b16 %v211
  %v252 = vunpack.c.l.b16 %v212
  %v253 = vunpack.c.l.b16 %v213
  %v254 = vunpack.c.l.b16 %v214
  %v255 = vpack.c.b16 %v240, %v239
  %v256 = vpack.c.b16 %v242, %v241
  %v257 = vpack.c.b16 %v244, %v243
  %v258 = vpack.c.b16 %v246, %v245
  %v259 = vpack.c.b16 %v248, %v247
  %v260 = vpack.c.b16 %v250, %v249
  %v261 = vpack.c.b16 %v252, %v251
  %v262 = vpack.c.b16 %v254, %v253
  %271 = vmatprep.subr.bf16.mxu0 0
  %272 = vmatpush1.bf16.msra.mxu0 %v222
  %273 = vmatprep.subr.bf16.mxu0 0
  %274 = vmatpush1.bf16.msra.mxu0 %v221
  %275 = vmatprep.subr.bf16.mxu0 0
  %276 = vmatpush1.bf16.msra.mxu0 %v220
  %277 = vmatprep.subr.bf16.mxu0 0
  %278 = vmatpush1.bf16.msra.mxu0 %v219
  %279 = vmatprep.subr.bf16.mxu0 0
  %280 = vmatpush1.bf16.msra.mxu0 %v218
  %281 = vmatprep.subr.bf16.mxu0 0
  %282 = vmatpush1.bf16.msra.mxu0 %v217
  %283 = vmatprep.subr.bf16.mxu0 0
  %284 = vmatpush1.bf16.msra.mxu0 %v216
  %285 = vmatprep.subr.bf16.mxu0 0
  %286 = vmatpush1.bf16.msra.mxu0 %v215
  %287 = vmatprep.subr.bf16.mxu0 0
  %288 = vmatpush2.bf16.msra.mxu0 0
  %289 = vmatprep.subr.bf16.mxu0 0
  %290 = vmatpush2.bf16.msra.mxu0 0
  %291 = vmatprep.subr.bf16.mxu0 0
  %292 = vmatpush2.bf16.msra.mxu0 0
  %293 = vmatprep.subr.bf16.mxu0 0
  %294 = vmatpush2.bf16.msra.mxu0 0
  %295 = vmatprep.subr.bf16.mxu0 0
  %296 = vmatpush2.bf16.msra.mxu0 0
  %297 = vmatprep.subr.bf16.mxu0 0
  %298 = vmatpush2.bf16.msra.mxu0 0
  %299 = vmatprep.subr.bf16.mxu0 0
  %300 = vmatpush2.bf16.msra.mxu0 0
  %301 = vmatprep.subr.bf16.mxu0 0
  %302 = vmatpush2.bf16.msra.mxu0 0
  %303 = vmatprep.mubr.bf16.mxu0 0
  %304 = vmatmul.mubr.bf16.gmra.mxu0 %v255
  %v305 = vpop.f32.mrf.mxu0
  %v306 = vadd.f32 0.0, %v305
  %v307 = vpop.f32.mrf.mxu0
  %v308 = vpop.f32.mrf.mxu0
  %v309 = vadd.f32 0.0, %v308
  %v310 = vpop.f32.mrf.mxu0
  %311 = vmatprep.mubr.bf16.mxu0 0
  %312 = vmatmul.mubr.bf16.gmra.mxu0 %v256
  %v313 = vpop.f32.mrf.mxu0
  %v314 = vadd.f32 0.0, %v313
  %v315 = vpop.f32.mrf.mxu0
  %v316 = vpop.f32.mrf.mxu0
  %v317 = vadd.f32 0.0, %v316
  %v318 = vpop.f32.mrf.mxu0
  %319 = vmatprep.mubr.bf16.mxu0 0
  %320 = vmatmul.mubr.bf16.gmra.mxu0 %v257
  %v321 = vpop.f32.mrf.mxu0
  %v322 = vadd.f32 0.0, %v321
  %v323 = vpop.f32.mrf.mxu0
  %v324 = vpop.f32.mrf.mxu0
  %v325 = vadd.f32 0.0, %v324
  %v326 = vpop.f32.mrf.mxu0
  %327 = vmatprep.mubr.bf16.mxu0 0
  %328 = vmatmul.mubr.bf16.gmra.mxu0 %v258
  %v329 = vpop.f32.mrf.mxu0
  %v330 = vadd.f32 0.0, %v329
  %v331 = vpop.f32.mrf.mxu0
  %v332 = vpop.f32.mrf.mxu0
  %v333 = vadd.f32 0.0, %v332
  %v334 = vpop.f32.mrf.mxu0
  %335 = vmatprep.mubr.bf16.mxu0 0
  %336 = vmatmul.mubr.bf16.gmra.mxu0 %v259
  %v337 = vpop.f32.mrf.mxu0
  %v338 = vadd.f32 0.0, %v337
  %v339 = vpop.f32.mrf.mxu0
  %v340 = vpop.f32.mrf.mxu0
  %v341 = vadd.f32 0.0, %v340
  %v342 = vpop.f32.mrf.mxu0
  %343 = vmatprep.mubr.bf16.mxu0 0
  %344 = vmatmul.mubr.bf16.gmra.mxu0 %v260
  %v345 = vpop.f32.mrf.mxu0
  %v346 = vadd.f32 0.0, %v345
  %v347 = vpop.f32.mrf.mxu0
  %v348 = vpop.f32.mrf.mxu0
  %v349 = vadd.f32 0.0, %v348
  %v350 = vpop.f32.mrf.mxu0
  %351 = vmatprep.mubr.bf16.mxu0 0
  %352 = vmatmul.mubr.bf16.gmra.mxu0 %v261
  %v353 = vpop.f32.mrf.mxu0
  %v354 = vadd.f32 0.0, %v353
  %v355 = vpop.f32.mrf.mxu0
  %v356 = vpop.f32.mrf.mxu0
  %v357 = vadd.f32 0.0, %v356
  %v358 = vpop.f32.mrf.mxu0
  %359 = vmatprep.mubr.bf16.mxu0 0
  %360 = vmatmul.mubr.bf16.gmra.mxu0 %v262
  %v361 = vpop.f32.mrf.mxu0
  %v362 = vadd.f32 0.0, %v361
  %v363 = vpop.f32.mrf.mxu0
  %v364 = vpop.f32.mrf.mxu0
  %v365 = vadd.f32 0.0, %v364
  %v366 = vpop.f32.mrf.mxu0
  %367 = vdwg.mxu0
  %v368 = vadd.f32 %v183, %v306
  %v369 = vadd.f32 %v184, %v309
  %v370 = vadd.f32 %v185, %v314
  %v371 = vadd.f32 %v186, %v317
  %v372 = vadd.f32 %v187, %v322
  %v373 = vadd.f32 %v188, %v325
  %v374 = vadd.f32 %v189, %v330
  %v375 = vadd.f32 %v190, %v333
  %v376 = vadd.f32 %v191, %v338
  %v377 = vadd.f32 %v192, %v341
  %v378 = vadd.f32 %v193, %v346
  %v379 = vadd.f32 %v194, %v349
  %v380 = vadd.f32 %v195, %v354
  %v381 = vadd.f32 %v196, %v357
  %v382 = vadd.f32 %v197, %v362
  %v383 = vadd.f32 %v198, %v365
  %384 = vst [vmem:[#allocation2] sm:$0xff] %v368
  %385 = vst [vmem:[#allocation2 + $0x8] sm:$0xff] %v369
  %386 = vst [vmem:[#allocation2 + $0x10] sm:$0xff] %v370
  %387 = vst [vmem:[#allocation2 + $0x18] sm:$0xff] %v371
  %388 = vst [vmem:[#allocation2 + $0x20] sm:$0xff] %v372
  %389 = vst [vmem:[#allocation2 + $0x28] sm:$0xff] %v373
  %390 = vst [vmem:[#allocation2 + $0x30] sm:$0xff] %v374
  %391 = vst [vmem:[#allocation2 + $0x38] sm:$0xff] %v375
  %392 = vst [vmem:[#allocation2 + $0x40] sm:$0xff] %v376
  %393 = vst [vmem:[#allocation2 + $0x48] sm:$0xff] %v377
  %394 = vst [vmem:[#allocation2 + $0x50] sm:$0xff] %v378
  %395 = vst [vmem:[#allocation2 + $0x58] sm:$0xff] %v379
  %396 = vst [vmem:[#allocation2 + $0x60] sm:$0xff] %v380
  %397 = vst [vmem:[#allocation2 + $0x68] sm:$0xff] %v381
  %398 = vst [vmem:[#allocation2 + $0x70] sm:$0xff] %v382
  %399 = vst [vmem:[#allocation2 + $0x78] sm:$0xff] %v383
  // Predicated region
  $region22: #{gcn_forward.5} parent=0 // pred_check
    %p400 = pneg %p18
  $region23: #{gcn_forward.5} parent=0 // pred_check_branch
    %402 = sbr.rel (%p400) target = $region25
  $region24: #{gcn_forward.5} parent=0 // pred_region
    %v403 = vld [vmem:[#allocation2] sm:$0xff]
    %v404 = vld [vmem:[#allocation2 + $0x8] sm:$0xff]
    %v405 = vld [vmem:[#allocation2 + $0x10] sm:$0xff]
    %v406 = vld [vmem:[#allocation2 + $0x18] sm:$0xff]
    %v407 = vld [vmem:[#allocation2 + $0x20] sm:$0xff]
    %v408 = vld [vmem:[#allocation2 + $0x28] sm:$0xff]
    %v409 = vld [vmem:[#allocation2 + $0x30] sm:$0xff]
    %v410 = vld [vmem:[#allocation2 + $0x38] sm:$0xff]
    %v411 = vld [vmem:[#allocation2 + $0x40] sm:$0xff]
    %v412 = vld [vmem:[#allocation2 + $0x48] sm:$0xff]
    %v413 = vld [vmem:[#allocation2 + $0x50] sm:$0xff]
    %v414 = vld [vmem:[#allocation2 + $0x58] sm:$0xff]
    %v415 = vld [vmem:[#allocation2 + $0x60] sm:$0xff]
    %v416 = vld [vmem:[#allocation2 + $0x68] sm:$0xff]
    %v417 = vld [vmem:[#allocation2 + $0x70] sm:$0xff]
    %v418 = vld [vmem:[#allocation2 + $0x78] sm:$0xff]
    %v419 = vld [vmem:[%s3] sm:$0x1]
    %v421 = vlaneseq
    %v422 = vshrl.u32 %v421, 7
    %v423 = vsub.s32 0, %v422
    %v424 = vrot.slane %v419, %v423
    %v426 = vadd.f32 %v403, %v424
    %v427 = vadd.f32 %v404, %v424
    %v428 = vadd.f32 %v405, %v424
    %v429 = vadd.f32 %v406, %v424
    %v430 = vadd.f32 %v407, %v424
    %v431 = vadd.f32 %v408, %v424
    %v432 = vadd.f32 %v409, %v424
    %v433 = vadd.f32 %v410, %v424
    %v434 = vadd.f32 %v411, %v424
    %v435 = vadd.f32 %v412, %v424
    %v436 = vadd.f32 %v413, %v424
    %v437 = vadd.f32 %v414, %v424
    %v438 = vadd.f32 %v415, %v424
    %v439 = vadd.f32 %v416, %v424
    %v440 = vadd.f32 %v417, %v424
    %v441 = vadd.f32 %v418, %v424
    %442 = vst [vmem:[%s4] sm:$0xff] %v426
    %443 = vst [vmem:[%s4 + $0x8] sm:$0xff] %v427
    %444 = vst [vmem:[%s4 + $0x10] sm:$0xff] %v428
    %445 = vst [vmem:[%s4 + $0x18] sm:$0xff] %v429
    %446 = vst [vmem:[%s4 + $0x20] sm:$0xff] %v430
    %447 = vst [vmem:[%s4 + $0x28] sm:$0xff] %v431
    %448 = vst [vmem:[%s4 + $0x30] sm:$0xff] %v432
    %449 = vst [vmem:[%s4 + $0x38] sm:$0xff] %v433
    %450 = vst [vmem:[%s4 + $0x40] sm:$0xff] %v434
    %451 = vst [vmem:[%s4 + $0x48] sm:$0xff] %v435
    %452 = vst [vmem:[%s4 + $0x50] sm:$0xff] %v436
    %453 = vst [vmem:[%s4 + $0x58] sm:$0xff] %v437
    %454 = vst [vmem:[%s4 + $0x60] sm:$0xff] %v438
    %455 = vst [vmem:[%s4 + $0x68] sm:$0xff] %v439
    %456 = vst [vmem:[%s4 + $0x70] sm:$0xff] %v440
    %457 = vst [vmem:[%s4 + $0x78] sm:$0xff] %v441
  $region25: #{gcn_forward.5} parent=0 // pred_fallthru
    _
  // Predicated region
  $region26: #{gcn_forward.5} parent=0 // pred_check
    _
  $region27: #{gcn_forward.5} parent=0 // pred_check_branch
    %459 = sbr.rel (0) target = $region29
  $region28: #{gcn_forward.5} parent=0 // pred_region
    _
  $region29: #{gcn_forward.5} parent=0 // pred_fallthru
    _
  // Predicated region
  $region30: #{gcn_forward.5} parent=0 // pred_check
    _
  $region31: #{gcn_forward.5} parent=0 // pred_check_branch
    %461 = sbr.rel (0) target = $region33
  $region32: #{gcn_forward.5} parent=0 // pred_region
    _
  $region33: #{gcn_forward.5} parent=0 // pred_fallthru
    _

</llo_original>
